<compile_context>
chip_gen: v5e
topology: v5e:2x2
jax: 0.10.0
libtpu: 0.0.40
codegen_flags: <defaults>
</compile_context>

<pallas_src>
import functools

import jax
import jax.numpy as jnp
from jax import lax
from jax.experimental import pallas as pl
from jax.experimental.pallas import tpu as pltpu


def _round_up(x, m):
    return ((x + m - 1) // m) * m


def _ssl_kernel(labels_ref, feats_ref, w_ref, b_ref, out_ref, *, num_layers):
    # ---- CooccurrenceMatrix ----
    labels_f32 = labels_ref[...]                                   # [B, Lp] f32 (0/1)
    labels_bf = labels_f32.astype(jnp.bfloat16)                    # exact for 0/1 labels
    # co = labels @ labels.T (contract last dims, no explicit transpose), f32 accumulate
    co = lax.dot_general(labels_bf, labels_bf, (((1,), (1,)), ((), ())),
                         preferred_element_type=jnp.float32)       # [B, B]
    row_sum = jnp.sum(labels_f32, axis=1, keepdims=True)           # [B, 1]
    inv_row_sum = pl.reciprocal(row_sum + 1e-6, approx=True)       # EUP, replaces divide

    # ---- GCN adjacency normalization, fully folded into row scales ----
    # adj = co * inv_row_sum[:,None]
    # deg = rowsum(adj) + 1e-5 = rowsum(co) * inv_row_sum + 1e-5   (single reduce of co)
    deg = jnp.sum(co, axis=1, keepdims=True) * inv_row_sum + 1e-5  # [B, 1]
    inv_sqrt = lax.rsqrt(deg)                                      # [B, 1], EUP
    # norm_adj @ S = (inv_sqrt * adj) @ (inv_sqrt * S)
    #             = (co * (inv_row_sum*inv_sqrt)[:,None]) @ (inv_sqrt[:,None] * S)
    # -> no K=1 outer-product matmul, no [1,B] transpose, pure VPU broadcasts.
    a_pre = (co * (inv_row_sum * inv_sqrt)).astype(jnp.bfloat16)   # [B, B]

    # ---- stacked GCN layers ----
    h = feats_ref[...]                                             # [B, Dp] f32
    for l in range(num_layers):
        w = w_ref[l].astype(jnp.bfloat16)                          # [Dp, Dp]
        b = b_ref[l]                                               # [1, Dp] f32
        support = jnp.dot(h.astype(jnp.bfloat16), w,
                          preferred_element_type=jnp.float32)      # [B, Dp]
        scaled = (inv_sqrt * support).astype(jnp.bfloat16)         # diag(D^-1/2) @ support
        out = jnp.dot(a_pre, scaled,
                      preferred_element_type=jnp.float32) + b      # [B, Dp]
        # relu inside GCN; the outer F.leaky_relu(x) with x >= 0 is the identity -> dropped.
        h = jnp.maximum(out, 0.0)
        # TODO(synk): dropout(p=0.2) is implemented as identity (inference mode).
    out_ref[...] = h


def semantic_similarity_learning(feats, labels, weights, biases):
    """feats [B,D] or [G,B,D]; labels [B,L] or [G,B,L]; weights [NL,D,D]; biases [NL,1,D]."""
    squeeze_graph = feats.ndim == 2
    if squeeze_graph:
        feats = feats[None]
        labels = labels[None]
    G, B, D = feats.shape
    L = labels.shape[-1]
    num_layers = weights.shape[0]

    # Lane/sublane padding: lane-dense (>=128-wide) blocks -> unmasked vector stores.
    Bp = _round_up(B, 8)
    Dp = _round_up(D, 128)
    Lp = _round_up(L, 128)

    feats_p = jnp.zeros((G, Bp, Dp), jnp.float32).at[:, :B, :D].set(
        feats.astype(jnp.float32))
    labels_p = jnp.zeros((G, Bp, Lp), jnp.float32).at[:, :B, :L].set(
        labels.astype(jnp.float32))
    w_p = jnp.zeros((num_layers, Dp, Dp), jnp.float32).at[:, :D, :D].set(
        weights.astype(jnp.float32))
    b_p = jnp.zeros((num_layers, 1, Dp), jnp.float32).at[:, :, :D].set(
        biases.astype(jnp.float32))

    kernel = functools.partial(_ssl_kernel, num_layers=num_layers)

    flops = G * (2 * Bp * Lp * Bp
                 + num_layers * (2 * Bp * Dp * Dp + 2 * Bp * Bp * Dp))
    bytes_accessed = 4 * (feats_p.size + labels_p.size + w_p.size + b_p.size
                          + G * Bp * Dp)

    out = pl.pallas_call(
        kernel,
        out_shape=jax.ShapeDtypeStruct((G, Bp, Dp), jnp.float32),
        grid=(G,),
        in_specs=[
            pl.BlockSpec((None, Bp, Lp), lambda g: (g, 0, 0)),          # labels (per graph)
            pl.BlockSpec((None, Bp, Dp), lambda g: (g, 0, 0)),          # feats  (per graph)
            pl.BlockSpec((num_layers, Dp, Dp), lambda g: (0, 0, 0)),    # weights (shared)
            pl.BlockSpec((num_layers, 1, Dp), lambda g: (0, 0, 0)),     # biases  (shared)
        ],
        out_specs=pl.BlockSpec((None, Bp, Dp), lambda g: (g, 0, 0)),
        compiler_params=pltpu.CompilerParams(
            # graphs axis is independent -> shard across TensorCores on megacore parts.
            dimension_semantics=("parallel",),
            # NOTE: at small B/D everything fits the default scoped VMEM; raise
            # vmem_limit_bytes here only when scaling B/D up (per-chip limits differ).
        ),
        cost_estimate=pl.CostEstimate(
            flops=flops,
            transcendentals=G * 2 * Bp,
            bytes_accessed=bytes_accessed,
        ),
    )(labels_p, feats_p, w_p, b_p)

    out = out[:, :B, :D]
    if squeeze_graph:
        out = out[0]
    return out


def _reference(feats, labels, weights, biases):
    # Pure-JAX f32 reference mirroring the PyTorch forward (eval mode for dropout).
    labels = labels.astype(jnp.float32)
    co = labels @ labels.T
    adj = co / (jnp.sum(labels, axis=1, keepdims=True) + 1e-6)
    deg = jnp.sum(adj, axis=1) + 1e-5
    inv_sqrt = 1.0 / jnp.sqrt(deg)
    norm_adj = inv_sqrt[:, None] * adj * inv_sqrt[None, :]
    h = feats.astype(jnp.float32)
    for l in range(weights.shape[0]):
        out = norm_adj @ (h @ weights[l]) + biases[l]
        x = jnp.maximum(out, 0.0)              # relu inside GCN
        h = jnp.where(x >= 0.0, x, 0.01 * x)   # outer F.leaky_relu (identity post-relu)
    return h


if __name__ == "__main__":
    B, L, D = 8, 16, 32          # nodes, num_labels, input_dim
    num_gcn_layers = 2
    key = jax.random.PRNGKey(0)
    k_feats, k_labels, k_w, k_b = jax.random.split(key, 4)

    feats = jax.random.normal(k_feats, (B, D), dtype=jnp.float32)
    labels = (jax.random.uniform(k_labels, (B, L)) > 0.5).astype(jnp.float32)
    labels = labels.at[:, 0].set(1.0)   # ensure every row has at least one label

    # GraphConvolution.reset_parameters: uniform(-stdv, stdv), stdv = 1/sqrt(in_features)
    stdv = 1.0 / (D ** 0.5)
    weights = jax.random.uniform(k_w, (num_gcn_layers, D, D),
                                 minval=-stdv, maxval=stdv, dtype=jnp.float32)
    biases = jax.random.uniform(k_b, (num_gcn_layers, 1, D),
                                minval=-stdv, maxval=stdv, dtype=jnp.float32)

    out = semantic_similarity_learning(feats, labels, weights, biases)
    out = jax.block_until_ready(out)

    ref = _reference(feats, labels, weights, biases)
    assert out.shape == (B, D)
    # Kernel uses bf16 MXU operands (f32 accumulation); compare to the f32 reference
    # with bf16-level tolerance.
    assert jnp.allclose(out, ref, rtol=2e-2, atol=2e-2), "mismatch vs JAX reference"

    print("KERNEL_OK")
</pallas_src>

<mosaic_0001>
module attributes {stable_mosaic.version = 11 : i64} {
  func.func @_ssl_kernel(%arg0: i32, %arg1: memref<1x8x128xf32, #tpu.memory_space<vmem>>, %arg2: memref<1x8x128xf32, #tpu.memory_space<vmem>>, %arg3: memref<2x128x128xf32, #tpu.memory_space<vmem>>, %arg4: memref<2x1x128xf32, #tpu.memory_space<vmem>>, %arg5: memref<1x8x128xf32, #tpu.memory_space<vmem>>) attributes {dimension_semantics = [#tpu.dimension_semantics<parallel>], iteration_bounds = array<i64: 1>, scalar_prefetch = 0 : i64, scratch_operands = 0 : i64, tpu.core_type = #tpu.core_type<tc>, window_params = [{transform_indices = @transform_0, window_bounds = array<i64: 1, 8, 128>}, {transform_indices = @transform_1, window_bounds = array<i64: 1, 8, 128>}, {pipeline_mode = #tpu.pipeline_mode<synchronous>, transform_indices = @transform_2, window_bounds = array<i64: 2, 128, 128>}, {pipeline_mode = #tpu.pipeline_mode<synchronous>, transform_indices = @transform_3, window_bounds = array<i64: 2, 1, 128>}, {transform_indices = @transform_4, window_bounds = array<i64: 1, 8, 128>}]} {
    %c0 = arith.constant 0 : index
    %c0_0 = arith.constant 0 : index
    %c0_1 = arith.constant 0 : index
    %0 = vector.load %arg1[%c0, %c0_0, %c0_1] : memref<1x8x128xf32, #tpu.memory_space<vmem>>, vector<1x8x128xf32>
    %1 = vector.shape_cast %0 : vector<1x8x128xf32> to vector<8x128xf32>
    %2 = arith.truncf %1 : vector<8x128xf32> to vector<8x128xbf16>
    %cst = arith.constant dense<0.000000e+00> : vector<8x8xf32>
    %3 = tpu.matmul %2, %2, %cst {dimension_numbers = #tpu.dot_dimension_numbers<[1], [1], [0], [0], [0, 0, 1, 0], [], []>} : vector<8x128xbf16>, vector<8x128xbf16>, vector<8x8xf32> -> vector<8x8xf32>
    %cst_2 = arith.constant dense<0.000000e+00> : vector<8xf32>
    %4 = vector.multi_reduction <add>, %1, %cst_2 [1] : vector<8x128xf32> to vector<8xf32>
    %5 = vector.shape_cast %4 : vector<8xf32> to vector<8x1xf32>
    %cst_3 = arith.constant 9.99999997E-7 : f32
    %6 = vector.broadcast %cst_3 : f32 to vector<8x1xf32>
    %7 = arith.addf %5, %6 : vector<8x1xf32>
    %8 = tpu.reciprocal %7 {approx = true} : vector<8x1xf32> -> vector<8x1xf32>
    %cst_4 = arith.constant dense<0.000000e+00> : vector<8xf32>
    %9 = vector.multi_reduction <add>, %3, %cst_4 [1] : vector<8x8xf32> to vector<8xf32>
    %10 = vector.shape_cast %9 : vector<8xf32> to vector<8x1xf32>
    %11 = arith.mulf %10, %8 : vector<8x1xf32>
    %cst_5 = arith.constant 9.99999974E-6 : f32
    %12 = vector.broadcast %cst_5 : f32 to vector<8x1xf32>
    %13 = arith.addf %11, %12 : vector<8x1xf32>
    %14 = math.rsqrt %13 : vector<8x1xf32>
    %15 = arith.mulf %8, %14 : vector<8x1xf32>
    %16 = vector.broadcast %15 : vector<8x1xf32> to vector<8x8xf32>
    %17 = arith.mulf %3, %16 : vector<8x8xf32>
    %18 = arith.truncf %17 : vector<8x8xf32> to vector<8x8xbf16>
    %c0_6 = arith.constant 0 : index
    %c0_7 = arith.constant 0 : index
    %c0_8 = arith.constant 0 : index
    %19 = vector.load %arg2[%c0_6, %c0_7, %c0_8] : memref<1x8x128xf32, #tpu.memory_space<vmem>>, vector<1x8x128xf32>
    %20 = vector.shape_cast %19 : vector<1x8x128xf32> to vector<8x128xf32>
    %c0_9 = arith.constant 0 : index
    %c0_10 = arith.constant 0 : index
    %c0_11 = arith.constant 0 : index
    %21 = vector.load %arg3[%c0_9, %c0_10, %c0_11] : memref<2x128x128xf32, #tpu.memory_space<vmem>>, vector<1x128x128xf32>
    %22 = vector.shape_cast %21 : vector<1x128x128xf32> to vector<128x128xf32>
    %23 = arith.truncf %22 : vector<128x128xf32> to vector<128x128xbf16>
    %c0_12 = arith.constant 0 : index
    %c0_13 = arith.constant 0 : index
    %c0_14 = arith.constant 0 : index
    %24 = vector.load %arg4[%c0_12, %c0_13, %c0_14] : memref<2x1x128xf32, #tpu.memory_space<vmem>>, vector<1x1x128xf32>
    %25 = vector.shape_cast %24 : vector<1x1x128xf32> to vector<1x128xf32>
    %26 = arith.truncf %20 : vector<8x128xf32> to vector<8x128xbf16>
    %cst_15 = arith.constant dense<0.000000e+00> : vector<8x128xf32>
    %27 = tpu.matmul %26, %23, %cst_15 {dimension_numbers = #tpu.dot_dimension_numbers<[1], [0], [0], [1], [0, 0, 1, 1], [], []>} : vector<8x128xbf16>, vector<128x128xbf16>, vector<8x128xf32> -> vector<8x128xf32>
    %28 = vector.broadcast %14 : vector<8x1xf32> to vector<8x128xf32>
    %29 = arith.mulf %28, %27 : vector<8x128xf32>
    %30 = arith.truncf %29 : vector<8x128xf32> to vector<8x128xbf16>
    %cst_16 = arith.constant dense<0.000000e+00> : vector<8x128xf32>
    %31 = tpu.matmul %18, %30, %cst_16 {dimension_numbers = #tpu.dot_dimension_numbers<[1], [0], [0], [1], [0, 0, 1, 1], [], []>} : vector<8x8xbf16>, vector<8x128xbf16>, vector<8x128xf32> -> vector<8x128xf32>
    %32 = vector.broadcast %25 : vector<1x128xf32> to vector<8x128xf32>
    %33 = arith.addf %31, %32 : vector<8x128xf32>
    %cst_17 = arith.constant 0.000000e+00 : f32
    %34 = vector.broadcast %cst_17 : f32 to vector<8x128xf32>
    %35 = arith.maximumf %33, %34 : vector<8x128xf32>
    %c1 = arith.constant 1 : index
    %c0_18 = arith.constant 0 : index
    %c0_19 = arith.constant 0 : index
    %36 = vector.load %arg3[%c1, %c0_18, %c0_19] : memref<2x128x128xf32, #tpu.memory_space<vmem>>, vector<1x128x128xf32>
    %37 = vector.shape_cast %36 : vector<1x128x128xf32> to vector<128x128xf32>
    %38 = arith.truncf %37 : vector<128x128xf32> to vector<128x128xbf16>
    %c1_20 = arith.constant 1 : index
    %c0_21 = arith.constant 0 : index
    %c0_22 = arith.constant 0 : index
    %39 = vector.load %arg4[%c1_20, %c0_21, %c0_22] : memref<2x1x128xf32, #tpu.memory_space<vmem>>, vector<1x1x128xf32>
    %40 = vector.shape_cast %39 : vector<1x1x128xf32> to vector<1x128xf32>
    %41 = arith.truncf %35 : vector<8x128xf32> to vector<8x128xbf16>
    %cst_23 = arith.constant dense<0.000000e+00> : vector<8x128xf32>
    %42 = tpu.matmul %41, %38, %cst_23 {dimension_numbers = #tpu.dot_dimension_numbers<[1], [0], [0], [1], [0, 0, 1, 1], [], []>} : vector<8x128xbf16>, vector<128x128xbf16>, vector<8x128xf32> -> vector<8x128xf32>
    %43 = vector.broadcast %14 : vector<8x1xf32> to vector<8x128xf32>
    %44 = arith.mulf %43, %42 : vector<8x128xf32>
    %45 = arith.truncf %44 : vector<8x128xf32> to vector<8x128xbf16>
    %cst_24 = arith.constant dense<0.000000e+00> : vector<8x128xf32>
    %46 = tpu.matmul %18, %45, %cst_24 {dimension_numbers = #tpu.dot_dimension_numbers<[1], [0], [0], [1], [0, 0, 1, 1], [], []>} : vector<8x8xbf16>, vector<8x128xbf16>, vector<8x128xf32> -> vector<8x128xf32>
    %47 = vector.broadcast %40 : vector<1x128xf32> to vector<8x128xf32>
    %48 = arith.addf %46, %47 : vector<8x128xf32>
    %cst_25 = arith.constant 0.000000e+00 : f32
    %49 = vector.broadcast %cst_25 : f32 to vector<8x128xf32>
    %50 = arith.maximumf %48, %49 : vector<8x128xf32>
    %c0_26 = arith.constant 0 : index
    %c0_27 = arith.constant 0 : index
    %c0_28 = arith.constant 0 : index
    %51 = vector.load %arg5[%c0_26, %c0_27, %c0_28] : memref<1x8x128xf32, #tpu.memory_space<vmem>>, vector<1x8x128xf32>
    %52 = vector.shape_cast %51 : vector<1x8x128xf32> to vector<8x128xf32>
    %53 = vector.shape_cast %50 : vector<8x128xf32> to vector<1x8x128xf32>
    tpu.vector_store %arg5[%c0_26, %c0_27, %c0_28], %53 {strides = array<i32>} : memref<1x8x128xf32, #tpu.memory_space<vmem>>, vector<1x8x128xf32>,
    return
  }
  func.func @transform_0(%arg0: i32) -> (i32, i32, i32) {
    %c0_i32 = arith.constant 0 : i32
    %c0_i32_0 = arith.constant 0 : i32
    %c0_i32_1 = arith.constant 0 : i32
    return %arg0, %c0_i32, %c0_i32_0 : i32, i32, i32
  }
  func.func @transform_1(%arg0: i32) -> (i32, i32, i32) {
    %c0_i32 = arith.constant 0 : i32
    %c0_i32_0 = arith.constant 0 : i32
    %c0_i32_1 = arith.constant 0 : i32
    return %arg0, %c0_i32, %c0_i32_0 : i32, i32, i32
  }
  func.func @transform_2(%arg0: i32) -> (i32, i32, i32) {
    %c0_i32 = arith.constant 0 : i32
    %c0_i32_0 = arith.constant 0 : i32
    %c0_i32_1 = arith.constant 0 : i32
    %c0_i32_2 = arith.constant 0 : i32
    return %c0_i32, %c0_i32_0, %c0_i32_1 : i32, i32, i32
  }
  func.func @transform_3(%arg0: i32) -> (i32, i32, i32) {
    %c0_i32 = arith.constant 0 : i32
    %c0_i32_0 = arith.constant 0 : i32
    %c0_i32_1 = arith.constant 0 : i32
    %c0_i32_2 = arith.constant 0 : i32
    return %c0_i32, %c0_i32_0, %c0_i32_1 : i32, i32, i32
  }
  func.func @transform_4(%arg0: i32) -> (i32, i32, i32) {
    %c0_i32 = arith.constant 0 : i32
    %c0_i32_0 = arith.constant 0 : i32
    %c0_i32_1 = arith.constant 0 : i32
    return %arg0, %c0_i32, %c0_i32_0 : i32, i32, i32
  }
}

</mosaic_0001>

<llo_original>
// kernel: tpu_custom_call.1
$region0: #{tpu_custom_call.1}
  #allocation0 [shape = 'u32[]', space=smem, size = 0x4, offset = 0x4, fixed_abs, tag = 'smem constant byte address 0x4 - core index']
  #allocation1 [shape = 'u32[72,128]{1,0:T(1,128)}', space=vmem, size = 0x9000, scoped, tag = 'internal scratch']
  %s0 = inlined_call_operand.hbm [shape: f32[1,8,128], index: 0, kind: input, shape index: {}]
  %s1 = inlined_call_operand.hbm [shape: f32[1,8,128], index: 1, kind: input, shape index: {}]
  %s2 = inlined_call_operand.hbm [shape: f32[2,128,128], index: 2, kind: input, shape index: {}]
  %s3 = inlined_call_operand.vmem [shape: f32[2,1,128], index: 3, kind: input, shape index: {}]
  %s4 = inlined_call_operand.hbm [shape: f32[1,8,128], index: 4, kind: output, shape index: {}]
  %s5 = sld [smem:[#allocation0]]
  $region38: #{tpu_custom_call.1} parent=0
    _
  %s7 = ssub.s32 1, %s5
  %s8 = scalar_select 0, %s7, %s5
  $region1: #{tpu_custom_call.1} parent=0
    #allocation2 [shape = 'u8[4096]{0}', space=vmem, size = 0x1000, scoped, tag = 'input window, operand 0, single buffered']
    #allocation3 [shape = 's32[1]{0}', space=sflag, size = 0x4, scoped, tag = 'scoped memory for tpu_custom_call.1']
    #allocation4 [shape = 's32[1]{0}', space=sflag, size = 0x4, scoped, tag = 'scoped memory for tpu_custom_call.1']
    #allocation5 [shape = 'u8[4096]{0}', space=vmem, size = 0x1000, scoped, tag = 'input window, operand 1, single buffered']
    #allocation6 [shape = 's32[1]{0}', space=sflag, size = 0x4, scoped, tag = 'scoped memory for tpu_custom_call.1']
    #allocation7 [shape = 'u8[131072]{0}', space=vmem, size = 0x20000, scoped, tag = 'input window, operand 2, single buffered']
    #allocation8 [shape = 'u8[4096]{0}', space=vmem, size = 0x1000, scoped, tag = 'output window, operand 0, single buffered']
    %9 = vsyncpa [#allocation3], 0
    %10 = vsyncpa [#allocation6], 0
    %11 = vsyncpa [#allocation4], 0
    // Predicated region
    $region2: #{tpu_custom_call.1} parent=1 // pred_check
      _
    $region3: #{tpu_custom_call.1} parent=1 // pred_check_branch
      %13 = sbr.rel (0) target = $region5
    $region4: #{tpu_custom_call.1} parent=1 // pred_region
      %15 = vsyncadd [#allocation3], 0
      %s17 = sshll.u32 %s0, 4
      %s18 = int_to_ptr.hbm [resolvable:$true] %s17
      %s19 = sshll.u32 [#allocation2], 4
      %s20 = int_to_ptr.vmem [resolvable:$true] %s19
      %22 = dma.hbm_to_vmem [thread:$0]  %s18, 128, %s20, [#allocation3]
    $region5: #{tpu_custom_call.1} parent=1 // pred_fallthru
      _
    // Predicated region
    $region6: #{tpu_custom_call.1} parent=1 // pred_check
      _
    $region7: #{tpu_custom_call.1} parent=1 // pred_check_branch
      %24 = sbr.rel (0) target = $region9
    $region8: #{tpu_custom_call.1} parent=1 // pred_region
      %26 = vsyncadd [#allocation6], 0
      %s28 = sshll.u32 %s1, 4
      %s29 = int_to_ptr.hbm [resolvable:$true] %s28
      %s30 = sshll.u32 [#allocation5], 4
      %s31 = int_to_ptr.vmem [resolvable:$true] %s30
      %33 = dma.hbm_to_vmem [thread:$0]  %s29, 128, %s31, [#allocation6]
    $region9: #{tpu_custom_call.1} parent=1 // pred_fallthru
      _
    // Predicated region
    $region10: #{tpu_custom_call.1} parent=1 // pred_check
      _
    $region11: #{tpu_custom_call.1} parent=1 // pred_check_branch
      %35 = sbr.rel (0) target = $region13
    $region12: #{tpu_custom_call.1} parent=1 // pred_region
      %37 = vsyncadd [#allocation6], 0
      %s38 = sshll.u32 %s2, 4
      %s39 = int_to_ptr.hbm [resolvable:$true] %s38
      %s40 = sshll.u32 [#allocation7], 4
      %s41 = int_to_ptr.vmem [resolvable:$true] %s40
      %46 = dma.hbm_to_vmem [thread:$0]  %s39, 4096, %s41, [#allocation6], 128, 128, 8
    $region13: #{tpu_custom_call.1} parent=1 // pred_fallthru
      _
    // Predicated region
    $region14: #{tpu_custom_call.1} parent=1 // pred_check
      _
    $region15: #{tpu_custom_call.1} parent=1 // pred_check_branch
      %48 = sbr.rel (0) target = $region17
    $region16: #{tpu_custom_call.1} parent=1 // pred_region
      _
    $region17: #{tpu_custom_call.1} parent=1 // pred_fallthru
      _
    // Predicated region
    $region18: #{tpu_custom_call.1} parent=1 // pred_check
      _
    $region19: #{tpu_custom_call.1} parent=1 // pred_check_branch
      %50 = sbr.rel (0) target = $region21
    $region20: #{tpu_custom_call.1} parent=1 // pred_region
      %52 = dma.done [#allocation3], 128
    $region21: #{tpu_custom_call.1} parent=1 // pred_fallthru
      _
    // Predicated region
    $region22: #{tpu_custom_call.1} parent=1 // pred_check
      _
    $region23: #{tpu_custom_call.1} parent=1 // pred_check_branch
      %54 = sbr.rel (0) target = $region25
    $region24: #{tpu_custom_call.1} parent=1 // pred_region
      %56 = dma.done [#allocation6], 128
    $region25: #{tpu_custom_call.1} parent=1 // pred_fallthru
      _
    // Predicated region
    $region26: #{tpu_custom_call.1} parent=1 // pred_check
      _
    $region27: #{tpu_custom_call.1} parent=1 // pred_check_branch
      %58 = sbr.rel (0) target = $region29
    $region28: #{tpu_custom_call.1} parent=1 // pred_region
      %60 = dma.done [#allocation6], 4096
    $region29: #{tpu_custom_call.1} parent=1 // pred_fallthru
      _
    %v62 = vld [vmem:[#allocation2] sm:$0xff]
    %v63 = vpack.c.bf16 %v62, %v62
    %64 = vmatpush.bf16.xpose.msra.mxu0 0
    %65 = vmatpush.bf16.xpose.msra.mxu0 0
    %66 = vmatpush.bf16.xpose.msra.mxu0 0
    %67 = vmatpush.bf16.xpose.msra.mxu0 0
    %68 = vmatpush.bf16.xpose.msra.mxu0 0
    %69 = vmatpush.bf16.xpose.msra.mxu0 0
    %70 = vmatpush.bf16.xpose.msra.mxu0 0
    %71 = vmatpush.bf16.xpose.msra.mxu0 %v63
    %72 = vmatmul.bf16.gmra.mxu0 %v63
    %v73 = vpop.f32.mrf.mxu0
    %v74 = vadd.f32 0.0, %v73
    %v75 = vpop.f32.mrf.mxu0
    %76 = vdwg.mxu0
    %77 = vadd.xlane.f32.xlu0 %v62
    %v78 = vpop.xlane.xlu0 %77
    %v79 = vadd.f32 %v78, 1e-06
    %v80 = vrcp.pop %v79
    %vm81 = vcmask 64512
    %v82 = vsel %vm81, %v74, 0.0
    %83 = vadd.xlane.f32.xlu0 %v82
    %v84 = vpop.xlane.xlu0 %83
    %v85 = vmul.f32 %v84, %v80
    %v86 = vadd.f32 %v85, 1e-05
    %v87 = vrsqrt.pop %v86
    %v88 = vmul.f32 %v87, %v86
    %v89 = vmul.f32 %v88, %v87
    %v90 = vmul.f32 0.5, %v89
    %v91 = vsub.f32 1.5, %v90
    %v92 = vmul.f32 %v87, %v91
    %vm93 = vweird.f32 %v86
    %vm94 = vweird.f32 %v87
    %vm95 = vmor %vm93, %vm94
    %v96 = vsel %vm95, %v87, %v92
    %v97 = vmul.f32 %v80, %v96
    %v98 = vmul.f32 %v74, %v97
    %v99 = vpack.c.bf16 %v98, %v98
    %v100 = vld [vmem:[#allocation5] sm:$0xff]
    %v101 = vld [vmem:[#allocation7] sm:$0xff]
    %v102 = vld [vmem:[#allocation7 + $0x8] sm:$0xff]
    %v103 = vld [vmem:[#allocation7 + $0x10] sm:$0xff]
    %v104 = vld [vmem:[#allocation7 + $0x18] sm:$0xff]
    %v105 = vld [vmem:[#allocation7 + $0x20] sm:$0xff]
    %v106 = vld [vmem:[#allocation7 + $0x28] sm:$0xff]
    %v107 = vld [vmem:[#allocation7 + $0x30] sm:$0xff]
    %v108 = vld [vmem:[#allocation7 + $0x38] sm:$0xff]
    %v109 = vld [vmem:[#allocation7 + $0x40] sm:$0xff]
    %v110 = vld [vmem:[#allocation7 + $0x48] sm:$0xff]
    %v111 = vld [vmem:[#allocation7 + $0x50] sm:$0xff]
    %v112 = vld [vmem:[#allocation7 + $0x58] sm:$0xff]
    %v113 = vld [vmem:[#allocation7 + $0x60] sm:$0xff]
    %v114 = vld [vmem:[#allocation7 + $0x68] sm:$0xff]
    %v115 = vld [vmem:[#allocation7 + $0x70] sm:$0xff]
    %v116 = vld [vmem:[#allocation7 + $0x78] sm:$0xff]
    %v117 = vpack.c.bf16 %v102, %v101
    %v118 = vpack.c.bf16 %v104, %v103
    %v119 = vpack.c.bf16 %v106, %v105
    %v120 = vpack.c.bf16 %v108, %v107
    %v121 = vpack.c.bf16 %v110, %v109
    %v122 = vpack.c.bf16 %v112, %v111
    %v123 = vpack.c.bf16 %v114, %v113
    %v124 = vpack.c.bf16 %v116, %v115
    %v125 = vld [vmem:[%s3] sm:$0x1]
    %v126 = vpack.c.bf16 %v100, %v100
    %127 = vmatpush.bf16.msra.mxu0 %v124
    %128 = vmatpush.bf16.msra.mxu0 %v123
    %129 = vmatpush.bf16.msra.mxu0 %v122
    %130 = vmatpush.bf16.msra.mxu0 %v121
    %131 = vmatpush.bf16.msra.mxu0 %v120
    %132 = vmatpush.bf16.msra.mxu0 %v119
    %133 = vmatpush.bf16.msra.mxu0 %v118
    %134 = vmatpush.bf16.msra.mxu0 %v117
    %135 = vmatmul.bf16.gmra.mxu0 %v126
    %v136 = vpop.f32.mrf.mxu0
    %v137 = vadd.f32 0.0, %v136
    %v138 = vpop.f32.mrf.mxu0
    %139 = vdwg.mxu0
    %v140 = vmul.f32 %v96, %v137
    %v141 = vpack.c.bf16 %v140, %v140
    %v143 = vperm.slane %v125, 0
    %v146 = vsel %vm81, %v99, 0
    %vm148 = vcmask 1043456
    %v150 = vsel %vm148, %v141, 0
    %152 = vmatpush.bf16.msra.mxu0 0
    %153 = vmatpush.bf16.msra.mxu0 0
    %154 = vmatpush.bf16.msra.mxu0 0
    %155 = vmatpush.bf16.msra.mxu0 0
    %156 = vmatpush.bf16.msra.mxu0 0
    %157 = vmatpush.bf16.msra.mxu0 0
    %158 = vmatpush.bf16.msra.mxu0 0
    %159 = vmatpush.bf16.msra.mxu0 %v150
    %160 = vmatmul.bf16.gmra.mxu0 %v146
    %v161 = vpop.f32.mrf.mxu0
    %v162 = vadd.f32 %v143, %v161
    %v163 = vpop.f32.mrf.mxu0
    %164 = vdwg.mxu0
    %v165 = vmax.f32 %v162, 0.0
    %s166 = scalar_lea.vmem [#allocation7], 128
    %v167 = vld [vmem:[%s166] sm:$0xff]
    %v168 = vld [vmem:[%s166 + $0x8] sm:$0xff]
    %v169 = vld [vmem:[%s166 + $0x10] sm:$0xff]
    %v170 = vld [vmem:[%s166 + $0x18] sm:$0xff]
    %v171 = vld [vmem:[%s166 + $0x20] sm:$0xff]
    %v172 = vld [vmem:[%s166 + $0x28] sm:$0xff]
    %v173 = vld [vmem:[%s166 + $0x30] sm:$0xff]
    %v174 = vld [vmem:[%s166 + $0x38] sm:$0xff]
    %v175 = vld [vmem:[%s166 + $0x40] sm:$0xff]
    %v176 = vld [vmem:[%s166 + $0x48] sm:$0xff]
    %v177 = vld [vmem:[%s166 + $0x50] sm:$0xff]
    %v178 = vld [vmem:[%s166 + $0x58] sm:$0xff]
    %v179 = vld [vmem:[%s166 + $0x60] sm:$0xff]
    %v180 = vld [vmem:[%s166 + $0x68] sm:$0xff]
    %v181 = vld [vmem:[%s166 + $0x70] sm:$0xff]
    %v182 = vld [vmem:[%s166 + $0x78] sm:$0xff]
    %v183 = vpack.c.bf16 %v168, %v167
    %v184 = vpack.c.bf16 %v170, %v169
    %v185 = vpack.c.bf16 %v172, %v171
    %v186 = vpack.c.bf16 %v174, %v173
    %v187 = vpack.c.bf16 %v176, %v175
    %v188 = vpack.c.bf16 %v178, %v177
    %v189 = vpack.c.bf16 %v180, %v179
    %v190 = vpack.c.bf16 %v182, %v181
    %s191 = scalar_lea.vmem %s3, 1
    %v192 = vld [vmem:[%s191] sm:$0x1]
    %v193 = vpack.c.bf16 %v165, %v165
    %194 = vmatpush.bf16.msra.mxu0 %v190
    %195 = vmatpush.bf16.msra.mxu0 %v189
    %196 = vmatpush.bf16.msra.mxu0 %v188
    %197 = vmatpush.bf16.msra.mxu0 %v187
    %198 = vmatpush.bf16.msra.mxu0 %v186
    %199 = vmatpush.bf16.msra.mxu0 %v185
    %200 = vmatpush.bf16.msra.mxu0 %v184
    %201 = vmatpush.bf16.msra.mxu0 %v183
    %202 = vmatmul.bf16.gmra.mxu0 %v193
    %v203 = vpop.f32.mrf.mxu0
    %v204 = vadd.f32 0.0, %v203
    %v205 = vpop.f32.mrf.mxu0
    %206 = vdwg.mxu0
    %v207 = vmul.f32 %v96, %v204
    %v208 = vpack.c.bf16 %v207, %v207
    %v210 = vperm.slane %v192, 0
    %v213 = vsel %vm148, %v208, 0
    %215 = vmatpush.bf16.msra.mxu0 0
    %216 = vmatpush.bf16.msra.mxu0 0
    %217 = vmatpush.bf16.msra.mxu0 0
    %218 = vmatpush.bf16.msra.mxu0 0
    %219 = vmatpush.bf16.msra.mxu0 0
    %220 = vmatpush.bf16.msra.mxu0 0
    %221 = vmatpush.bf16.msra.mxu0 0
    %222 = vmatpush.bf16.msra.mxu0 %v213
    %223 = vmatmul.bf16.gmra.mxu0 %v146
    %v224 = vpop.f32.mrf.mxu0
    %v225 = vadd.f32 %v210, %v224
    %v226 = vpop.f32.mrf.mxu0
    %227 = vdwg.mxu0
    %v228 = vmax.f32 %v225, 0.0
    %229 = vst [vmem:[#allocation8] sm:$0xff] %v228
    // Predicated region
    $region30: #{tpu_custom_call.1} parent=1 // pred_check
      _
    $region31: #{tpu_custom_call.1} parent=1 // pred_check_branch
      %231 = sbr.rel (0) target = $region33
    $region32: #{tpu_custom_call.1} parent=1 // pred_region
      %233 = vsyncadd [#allocation4], 0
      %s235 = sshll.u32 [#allocation8], 4
      %s236 = int_to_ptr.vmem [resolvable:$true] %s235
      %s237 = sshll.u32 %s4, 4
      %s238 = int_to_ptr.hbm [resolvable:$true] %s237
      %240 = dma.vmem_to_hbm [thread:$0]  %s236, 128, %s238, [#allocation4]
    $region33: #{tpu_custom_call.1} parent=1 // pred_fallthru
      _
    // Predicated region
    $region34: #{tpu_custom_call.1} parent=1 // pred_check
      _
    $region35: #{tpu_custom_call.1} parent=1 // pred_check_branch
      %242 = sbr.rel (0) target = $region37
    $region36: #{tpu_custom_call.1} parent=1 // pred_region
      %244 = dma.done [#allocation4], 128
    $region37: #{tpu_custom_call.1} parent=1 // pred_fallthru
      _
    %245 = vsyncpa [#allocation3], 1
    %246 = vsyncpa [#allocation6], 1
    %247 = vsyncpa [#allocation4], 1

</llo_original>
